<compile_context>
chip_gen: v6e
topology: v6e:2x2x1
jax: 0.10.0
libtpu: 0.0.40
codegen_flags: <defaults>
</compile_context>

<pallas_src>
import functools
import math

import jax
import jax.numpy as jnp
from jax.experimental import pallas as pl
from jax.experimental.pallas import tpu as pltpu


def _round_up(x, m):
    return (x + m - 1) // m * m


@functools.lru_cache(maxsize=1)
def _physical_vmem_bytes():
    try:
        return int(pltpu.get_tpu_info().vmem_capacity_bytes)
    except Exception:
        return 64 * 2 ** 20  # conservative (v7x-sized) fallback


def _vmem_limit(working_set_bytes):
    """Scoped-VMEM request: working set + Mosaic scratch headroom, capped at
    ~85% of physical VMEM (headroom on v7x, full use of 128 MiB on v5e/v6e)."""
    hard_cap = int(0.85 * _physical_vmem_bytes())
    want = int(working_set_bytes) + 2 * 2 ** 20
    return max(min(want, hard_cap), min(16 * 2 ** 20, hard_cap))


# ----------------------------------------------------------------------------
# Kernels (one batch tile each)
# ----------------------------------------------------------------------------
def _dpp_kernel_folded(x_ref, wf_ref, bf_ref, *out_refs, out_pad, out_f,
                       emit_alpha):
    """Gating projection pre-folded into the fused weights.

    x_ref  : (TB, IN)          activations (input dtype; cast here)
    wf_ref : (IN, 3*OUT_pad)   [w_a | w_b | W_g_folded]   (compute dtype)
    bf_ref : (1,  3*OUT_pad)   [b_a | b_b | b_g_folded]   (f32)
    out    : (TB, OUT) [, alpha (TB, OUT)]
    """
    x = x_ref[...].astype(wf_ref.dtype)
    # Single wide MXU push for all three projections, f32 accumulation.
    h = jnp.dot(x, wf_ref[...], preferred_element_type=jnp.float32) + bf_ref[...]

    z_a = h[:, :out_pad]
    z_b = h[:, out_pad:2 * out_pad]
    alpha = jax.nn.sigmoid(h[:, 2 * out_pad:])            # EUP

    z_final = z_b + alpha * (z_a - z_b)                   # one fewer VPU mul

    out_refs[0][...] = z_final[:, :out_f].astype(out_refs[0].dtype)
    if emit_alpha:
        out_refs[1][...] = alpha[:, :out_f].astype(out_refs[1].dtype)


def _dpp_kernel_lowrank(x_ref, wf_ref, bf_ref, wgu_ref, bgu_ref, *out_refs,
                        out_pad, out_f, emit_alpha):
    """Gating kept factored (used when G is a strong low-rank bottleneck)."""
    x = x_ref[...].astype(wf_ref.dtype)
    h = jnp.dot(x, wf_ref[...], preferred_element_type=jnp.float32) + bf_ref[...]

    z_a = h[:, :out_pad]
    z_b = h[:, out_pad:2 * out_pad]
    x_g = h[:, 2 * out_pad:]

    g_logits = (jnp.dot(x_g.astype(wgu_ref.dtype), wgu_ref[...],
                        preferred_element_type=jnp.float32) + bgu_ref[...])
    alpha = jax.nn.sigmoid(g_logits)
    z_final = z_b + alpha * (z_a - z_b)

    out_refs[0][...] = z_final[:, :out_f].astype(out_refs[0].dtype)
    if emit_alpha:
        out_refs[1][...] = alpha[:, :out_f].astype(out_refs[1].dtype)


# ----------------------------------------------------------------------------
# One-time parameter preparation (transpose + pad + fuse + fold). NOT per-call.
# ----------------------------------------------------------------------------
def prepare_params(params, compute_dtype=jnp.bfloat16, fold_gating=None):
    """compute_dtype: weight dtype fed to the MXU (accumulation is always f32).
    bf16 (default) halves weight DMA/VMEM and runs the MXU at native rate; use
    jnp.float32 for exact parity with the f32 reference."""
    out_f, in_f = params["w_a"].shape
    g_dim = params["w_g_shared"].shape[0]
    out_pad = _round_up(out_f, 128)

    if fold_gating is None:
        # Fold unless G is a strong low-rank bottleneck.
        fold_gating = in_f * out_f <= 2 * (in_f * g_dim + g_dim * out_f)

    def pad_cols(a, cols):
        return jnp.pad(a, ((0, 0), (0, cols - a.shape[1])))

    def pad_vec(v, n):
        return jnp.pad(v, (0, n - v.shape[0]))

    hi = jax.lax.Precision.HIGHEST
    wa_t = params["w_a"].T.astype(jnp.float32)
    wb_t = params["w_b"].T.astype(jnp.float32)

    if fold_gating:
        # g_logits = (x @ wgs.T + bgs) @ wgu.T + bgu  ==  x @ W_g + b_g
        w_g = jnp.dot(params["w_g_unit"].astype(jnp.float32),
                      params["w_g_shared"].astype(jnp.float32), precision=hi).T
        b_g = (jnp.dot(params["w_g_unit"].astype(jnp.float32),
                       params["b_g_shared"].astype(jnp.float32), precision=hi)
               + params["b_g_unit"].astype(jnp.float32))
        w_fused = jnp.concatenate(
            [pad_cols(wa_t, out_pad), pad_cols(wb_t, out_pad),
             pad_cols(w_g, out_pad)], axis=1).astype(compute_dtype)
        b_fused = jnp.concatenate(
            [pad_vec(params["b_a"], out_pad), pad_vec(params["b_b"], out_pad),
             pad_vec(b_g, out_pad)]).reshape(1, 3 * out_pad).astype(jnp.float32)
        arrays = {"w_fused": w_fused, "b_fused": b_fused}
        g_pad = 0
    else:
        g_pad = _round_up(g_dim, 128)
        wgs_t = params["w_g_shared"].T.astype(jnp.float32)
        w_fused = jnp.concatenate(
            [pad_cols(wa_t, out_pad), pad_cols(wb_t, out_pad),
             pad_cols(wgs_t, g_pad)], axis=1).astype(compute_dtype)
        b_fused = jnp.concatenate(
            [pad_vec(params["b_a"], out_pad), pad_vec(params["b_b"], out_pad),
             pad_vec(params["b_g_shared"], g_pad)],
        ).reshape(1, 2 * out_pad + g_pad).astype(jnp.float32)
        wgu = jnp.pad(params["w_g_unit"].T,
                      ((0, g_pad - g_dim), (0, out_pad - out_f))
                      ).astype(compute_dtype)
        bgu = pad_vec(params["b_g_unit"], out_pad).reshape(1, out_pad).astype(
            jnp.float32)
        arrays = {"w_fused": w_fused, "b_fused": b_fused,
                  "w_g_unit_t": wgu, "b_g_unit": bgu}

    static = {"input_features": int(in_f), "output_features": int(out_f),
              "shared_g_dim": int(g_dim), "out_pad": int(out_pad),
              "g_pad": int(g_pad), "folded": bool(fold_gating)}
    return {"arrays": arrays, "static": static}


# ----------------------------------------------------------------------------
# Forward implementations
# ----------------------------------------------------------------------------
def _weight_spec_kwargs(wbuf):
    # wbuf == 1: single-buffer the constant-index (resident) weight blocks.
    # wbuf == 0: default (double) buffering.
    return {} if wbuf == 0 else {"pipeline_mode": pl.Buffered(buffer_count=wbuf)}


def _io_specs(B, tb, out_f, out_dtype, return_alpha):
    grid = (pl.cdiv(B, tb),)                 # ragged last tile; OOB rows discarded
    out_shape = [jax.ShapeDtypeStruct((B, out_f), out_dtype)]
    out_specs = [pl.BlockSpec((tb, out_f), lambda i: (i, 0))]
    if return_alpha:
        out_shape.append(jax.ShapeDtypeStruct((B, out_f), out_dtype))
        out_specs.append(pl.BlockSpec((tb, out_f), lambda i: (i, 0)))
    return grid, tuple(out_shape), tuple(out_specs)


@functools.partial(
    jax.jit,
    static_argnames=("out_f", "out_pad", "return_alpha", "batch_tile",
                     "out_dtype", "wbuf"))
def _forward_folded(x, w_fused, b_fused, *, out_f, out_pad, return_alpha,
                    batch_tile, out_dtype, wbuf):
    B, IN = x.shape
    W = w_fused.shape[1]                     # 3 * out_pad
    tb = batch_tile
    grid, out_shape, out_specs = _io_specs(B, tb, out_f, out_dtype, return_alpha)

    kernel = functools.partial(_dpp_kernel_folded, out_pad=out_pad,
                               out_f=out_f, emit_alpha=return_alpha)
    wkw = _weight_spec_kwargs(wbuf)
    in_specs = [
        pl.BlockSpec((tb, IN), lambda i: (i, 0)),          # x: batch-tiled, pipelined
        pl.BlockSpec((IN, W), lambda i: (0, 0), **wkw),    # fused weights: resident
        pl.BlockSpec((1, W), lambda i: (0, 0), **wkw),     # fused biases:  resident
    ]

    n_out = 2 if return_alpha else 1
    n_wbuf = wbuf if wbuf else 2
    working = (2 * tb * IN * x.dtype.itemsize
               + n_wbuf * (IN * W * w_fused.dtype.itemsize + W * 4)
               + 2 * n_out * tb * out_f * out_dtype.itemsize)

    results = pl.pallas_call(
        kernel,
        out_shape=out_shape,
        grid=grid,
        in_specs=in_specs,
        out_specs=out_specs,
        compiler_params=pltpu.CompilerParams(
            dimension_semantics=("parallel",),
            vmem_limit_bytes=_vmem_limit(working)),
    )(x, w_fused, b_fused)
    return results if return_alpha else results[0]


@functools.partial(
    jax.jit,
    static_argnames=("out_f", "out_pad", "return_alpha", "batch_tile",
                     "out_dtype", "wbuf"))
def _forward_lowrank(x, w_fused, b_fused, wgu, bgu, *, out_f, out_pad,
                     return_alpha, batch_tile, out_dtype, wbuf):
    B, IN = x.shape
    W = w_fused.shape[1]                     # 2*out_pad + g_pad
    g_pad = wgu.shape[0]
    tb = batch_tile
    grid, out_shape, out_specs = _io_specs(B, tb, out_f, out_dtype, return_alpha)

    kernel = functools.partial(_dpp_kernel_lowrank, out_pad=out_pad,
                               out_f=out_f, emit_alpha=return_alpha)
    wkw = _weight_spec_kwargs(wbuf)
    in_specs = [
        pl.BlockSpec((tb, IN), lambda i: (i, 0)),
        pl.BlockSpec((IN, W), lambda i: (0, 0), **wkw),
        pl.BlockSpec((1, W), lambda i: (0, 0), **wkw),
        pl.BlockSpec((g_pad, out_pad), lambda i: (0, 0), **wkw),
        pl.BlockSpec((1, out_pad), lambda i: (0, 0), **wkw),
    ]

    n_out = 2 if return_alpha else 1
    n_wbuf = wbuf if wbuf else 2
    w_isz = w_fused.dtype.itemsize
    working = (2 * tb * IN * x.dtype.itemsize
               + n_wbuf * (IN * W * w_isz + W * 4
                           + g_pad * out_pad * w_isz + out_pad * 4)
               + 2 * n_out * tb * out_f * out_dtype.itemsize)

    results = pl.pallas_call(
        kernel,
        out_shape=out_shape,
        grid=grid,
        in_specs=in_specs,
        out_specs=out_specs,
        compiler_params=pltpu.CompilerParams(
            dimension_semantics=("parallel",),
            vmem_limit_bytes=_vmem_limit(working)),
    )(x, w_fused, b_fused, wgu, bgu)
    return results if return_alpha else results[0]


def _choose_batch_tile(B):
    # <=512 rows per tile (near the measured HBM-roofline sweet spot), multiple
    # of 16, and >=2 grid steps whenever possible so v7x's two TensorCores both
    # get work over the "parallel" batch axis.
    if B <= 16:
        return _round_up(max(B, 8), 8)
    return min(512, _round_up(pl.cdiv(B, 2), 16))


_WEIGHT_BUF = 1  # try single-buffered resident weights; auto-fallback if rejected


def dpp_layer_shared_g(x, prepared, return_alpha=False, out_dtype=None):
    """x: [..., input_features]. prepared: output of prepare_params()."""
    global _WEIGHT_BUF
    st, ar = prepared["static"], prepared["arrays"]
    in_f, out_f = st["input_features"], st["output_features"]

    lead_shape = x.shape[:-1]
    x2d = x.reshape(-1, in_f)
    B = x2d.shape[0]
    tb = _choose_batch_tile(B)
    odt = (jax.dtypes.canonicalize_dtype(out_dtype) if out_dtype is not None
           else x2d.dtype)

    def run(wbuf):
        if st["folded"]:
            return _forward_folded(
                x2d, ar["w_fused"], ar["b_fused"],
                out_f=out_f, out_pad=st["out_pad"], return_alpha=return_alpha,
                batch_tile=tb, out_dtype=odt, wbuf=wbuf)
        return _forward_lowrank(
            x2d, ar["w_fused"], ar["b_fused"], ar["w_g_unit_t"], ar["b_g_unit"],
            out_f=out_f, out_pad=st["out_pad"], return_alpha=return_alpha,
            batch_tile=tb, out_dtype=odt, wbuf=wbuf)

    try:
        res = run(_WEIGHT_BUF)
    except Exception:
        if _WEIGHT_BUF == 0:
            raise
        _WEIGHT_BUF = 0          # this JAX rejects Buffered(1); use default buffering
        res = run(0)

    if return_alpha:
        out, alpha = res
        return (out.reshape(*lead_shape, out_f),
                alpha.reshape(*lead_shape, out_f))
    return res.reshape(*lead_shape, out_f)


# ----------------------------------------------------------------------------
# Init (mirrors the PyTorch _init_weights scheme) and pure-JAX reference.
# ----------------------------------------------------------------------------
def init_params(key, input_features, output_features, shared_g_dim):
    ks = jax.random.split(key, 8)

    def kaiming_uniform(k, shape, a=math.sqrt(5)):
        fan_in = shape[1]
        gain = math.sqrt(2.0 / (1.0 + a * a))
        bound = gain * math.sqrt(3.0 / fan_in)
        return jax.random.uniform(k, shape, jnp.float32, -bound, bound)

    def bias_uniform(k, shape, fan_in):
        bound = 1.0 / math.sqrt(fan_in) if fan_in > 0 else 0.0
        return jax.random.uniform(k, shape, jnp.float32, -bound, bound)

    return {
        "w_a": kaiming_uniform(ks[0], (output_features, input_features)),
        "b_a": bias_uniform(ks[1], (output_features,), input_features),
        "w_b": kaiming_uniform(ks[2], (output_features, input_features)),
        "b_b": bias_uniform(ks[3], (output_features,), input_features),
        "w_g_shared": kaiming_uniform(ks[4], (shared_g_dim, input_features)),
        "b_g_shared": bias_uniform(ks[5], (shared_g_dim,), input_features),
        "w_g_unit": kaiming_uniform(ks[6], (output_features, shared_g_dim)),
        "b_g_unit": bias_uniform(ks[7], (output_features,), shared_g_dim),
    }


def reference_forward(x, p):
    z_a = x @ p["w_a"].T + p["b_a"]
    z_b = x @ p["w_b"].T + p["b_b"]
    x_g = x @ p["w_g_shared"].T + p["b_g_shared"]
    g_logits = x_g @ p["w_g_unit"].T + p["b_g_unit"]
    alpha = jax.nn.sigmoid(g_logits)
    return alpha * z_a + (1.0 - alpha) * z_b, alpha


if __name__ == "__main__":
    # B=24 with 16-row tiles exercises the 2-step grid + ragged last tile.
    B, IN, OUT, G = 24, 32, 32, 16

    key = jax.random.PRNGKey(0)
    k_param, k_x = jax.random.split(key)
    params = init_params(k_param, IN, OUT, G)
    x = jax.random.normal(k_x, (B, IN), jnp.float32)

    z_ref, alpha_ref = reference_forward(x, params)

    # 1) f32 weights, folded gating (default fold decision for these sizes).
    prep_f32 = prepare_params(params, compute_dtype=jnp.float32)
    z32, a32 = dpp_layer_shared_g(x, prep_f32, return_alpha=True)
    z32_only = dpp_layer_shared_g(x, prep_f32, return_alpha=False)

    # 2) f32 weights, gating kept factored (exercises the low-rank kernel).
    prep_lr = prepare_params(params, compute_dtype=jnp.float32, fold_gating=False)
    z_lr, a_lr = dpp_layer_shared_g(x, prep_lr, return_alpha=True)

    # 3) bf16 weights (default fast path) -- looser tolerance by construction.
    prep_bf16 = prepare_params(params)
    z_bf, a_bf = dpp_layer_shared_g(x, prep_bf16, return_alpha=True)

    (z32, a32, z32_only, z_lr, a_lr, z_bf, a_bf) = jax.block_until_ready(
        (z32, a32, z32_only, z_lr, a_lr, z_bf, a_bf))

    assert jnp.allclose(z32, z_ref, atol=1e-4, rtol=1e-4), "folded f32 z mismatch"
    assert jnp.allclose(a32, alpha_ref, atol=1e-4, rtol=1e-4), "folded f32 alpha mismatch"
    assert jnp.allclose(z32_only, z_ref, atol=1e-4, rtol=1e-4), "no-alpha variant mismatch"
    assert jnp.allclose(z_lr, z_ref, atol=1e-5, rtol=1e-5), "low-rank f32 z mismatch"
    assert jnp.allclose(a_lr, alpha_ref, atol=1e-5, rtol=1e-5), "low-rank f32 alpha mismatch"
    assert jnp.allclose(z_bf, z_ref, atol=5e-2, rtol=5e-2), "bf16 z mismatch"
    assert jnp.allclose(a_bf, alpha_ref, atol=5e-2, rtol=5e-2), "bf16 alpha mismatch"

    print("KERNEL_OK")
</pallas_src>

<mosaic_0001>
module attributes {stable_mosaic.version = 11 : i64} {
  func.func @_dpp_kernel_folded(%arg0: i32, %arg1: memref<16x32xf32, #tpu.memory_space<vmem>>, %arg2: memref<32x384xf32, #tpu.memory_space<vmem>>, %arg3: memref<1x384xf32, #tpu.memory_space<vmem>>, %arg4: memref<16x32xf32, #tpu.memory_space<vmem>>, %arg5: memref<16x32xf32, #tpu.memory_space<vmem>>) attributes {dimension_semantics = [#tpu.dimension_semantics<parallel>], iteration_bounds = array<i64: 2>, scalar_prefetch = 0 : i64, scratch_operands = 0 : i64, tpu.core_type = #tpu.core_type<tc>, window_params = [{transform_indices = @transform_0, window_bounds = array<i64: 16, 32>}, {pipeline_mode = #tpu.pipeline_mode<synchronous>, transform_indices = @transform_1, window_bounds = array<i64: 32, 384>}, {pipeline_mode = #tpu.pipeline_mode<synchronous>, transform_indices = @transform_2, window_bounds = array<i64: 1, 384>}, {transform_indices = @transform_3, window_bounds = array<i64: 16, 32>}, {transform_indices = @transform_4, window_bounds = array<i64: 16, 32>}]} {
    %c0 = arith.constant 0 : index
    %c0_0 = arith.constant 0 : index
    %0 = vector.load %arg1[%c0, %c0_0] : memref<16x32xf32, #tpu.memory_space<vmem>>, vector<16x32xf32>
    %c0_1 = arith.constant 0 : index
    %c0_2 = arith.constant 0 : index
    %1 = vector.load %arg2[%c0_1, %c0_2] : memref<32x384xf32, #tpu.memory_space<vmem>>, vector<32x384xf32>
    %cst = arith.constant dense<0.000000e+00> : vector<16x384xf32>
    %2 = tpu.matmul %0, %1, %cst {dimension_numbers = #tpu.dot_dimension_numbers<[1], [0], [0], [1], [0, 0, 1, 1], [], []>} : vector<16x32xf32>, vector<32x384xf32>, vector<16x384xf32> -> vector<16x384xf32>
    %c0_3 = arith.constant 0 : index
    %c0_4 = arith.constant 0 : index
    %3 = vector.load %arg3[%c0_3, %c0_4] : memref<1x384xf32, #tpu.memory_space<vmem>>, vector<1x384xf32>
    %4 = vector.broadcast %3 : vector<1x384xf32> to vector<16x384xf32>
    %5 = arith.addf %2, %4 : vector<16x384xf32>
    %6 = vector.extract_strided_slice %5 {offsets = [0, 0], sizes = [16, 128], strides = [1, 1]} : vector<16x384xf32> to vector<16x128xf32>
    %7 = vector.extract_strided_slice %5 {offsets = [0, 128], sizes = [16, 128], strides = [1, 1]} : vector<16x384xf32> to vector<16x128xf32>
    %8 = vector.extract_strided_slice %5 {offsets = [0, 256], sizes = [16, 128], strides = [1, 1]} : vector<16x384xf32> to vector<16x128xf32>
    %9 = arith.negf %8 : vector<16x128xf32>
    %10 = math.exp %9 : vector<16x128xf32>
    %cst_5 = arith.constant 1.000000e+00 : f32
    %11 = vector.broadcast %cst_5 : f32 to vector<16x128xf32>
    %12 = arith.addf %11, %10 : vector<16x128xf32>
    %13 = arith.divf %11, %12 : vector<16x128xf32>
    %14 = arith.subf %6, %7 : vector<16x128xf32>
    %15 = arith.mulf %13, %14 : vector<16x128xf32>
    %16 = arith.addf %7, %15 : vector<16x128xf32>
    %17 = vector.extract_strided_slice %16 {offsets = [0, 0], sizes = [16, 32], strides = [1, 1]} : vector<16x128xf32> to vector<16x32xf32>
    %c0_6 = arith.constant 0 : index
    %c0_7 = arith.constant 0 : index
    %18 = vector.load %arg4[%c0_6, %c0_7] : memref<16x32xf32, #tpu.memory_space<vmem>>, vector<16x32xf32>
    tpu.vector_store %arg4[%c0_6, %c0_7], %17 {strides = array<i32>} : memref<16x32xf32, #tpu.memory_space<vmem>>, vector<16x32xf32>,
    %19 = vector.extract_strided_slice %13 {offsets = [0, 0], sizes = [16, 32], strides = [1, 1]} : vector<16x128xf32> to vector<16x32xf32>
    %c0_8 = arith.constant 0 : index
    %c0_9 = arith.constant 0 : index
    %20 = vector.load %arg5[%c0_8, %c0_9] : memref<16x32xf32, #tpu.memory_space<vmem>>, vector<16x32xf32>
    tpu.vector_store %arg5[%c0_8, %c0_9], %19 {strides = array<i32>} : memref<16x32xf32, #tpu.memory_space<vmem>>, vector<16x32xf32>,
    return
  }
  func.func @transform_0(%arg0: i32) -> (i32, i32) {
    %c0_i32 = arith.constant 0 : i32
    %c0_i32_0 = arith.constant 0 : i32
    return %arg0, %c0_i32 : i32, i32
  }
  func.func @transform_1(%arg0: i32) -> (i32, i32) {
    %c0_i32 = arith.constant 0 : i32
    %c0_i32_0 = arith.constant 0 : i32
    %c0_i32_1 = arith.constant 0 : i32
    return %c0_i32, %c0_i32_0 : i32, i32
  }
  func.func @transform_2(%arg0: i32) -> (i32, i32) {
    %c0_i32 = arith.constant 0 : i32
    %c0_i32_0 = arith.constant 0 : i32
    %c0_i32_1 = arith.constant 0 : i32
    return %c0_i32, %c0_i32_0 : i32, i32
  }
  func.func @transform_3(%arg0: i32) -> (i32, i32) {
    %c0_i32 = arith.constant 0 : i32
    %c0_i32_0 = arith.constant 0 : i32
    return %arg0, %c0_i32 : i32, i32
  }
  func.func @transform_4(%arg0: i32) -> (i32, i32) {
    %c0_i32 = arith.constant 0 : i32
    %c0_i32_0 = arith.constant 0 : i32
    return %arg0, %c0_i32 : i32, i32
  }
}

module attributes {stable_mosaic.version = 11 : i64} {
  func.func @_dpp_kernel_folded(%arg0: i32, %arg1: memref<16x32xf32, #tpu.memory_space<vmem>>, %arg2: memref<32x384xf32, #tpu.memory_space<vmem>>, %arg3: memref<1x384xf32, #tpu.memory_space<vmem>>, %arg4: memref<16x32xf32, #tpu.memory_space<vmem>>, %arg5: memref<16x32xf32, #tpu.memory_space<vmem>>) attributes {dimension_semantics = [#tpu.dimension_semantics<parallel>], iteration_bounds = array<i64: 2>, scalar_prefetch = 0 : i64, scratch_operands = 0 : i64, tpu.core_type = #tpu.core_type<tc>, window_params = [{transform_indices = @transform_0, window_bounds = array<i64: 16, 32>}, {pipeline_mode = #tpu.pipeline_mode<synchronous>, transform_indices = @transform_1, window_bounds = array<i64: 32, 384>}, {pipeline_mode = #tpu.pipeline_mode<synchronous>, transform_indices = @transform_2, window_bounds = array<i64: 1, 384>}, {transform_indices = @transform_3, window_bounds = array<i64: 16, 32>}, {transform_indices = @transform_4, window_bounds = array<i64: 16, 32>}]} {
    %c0 = arith.constant 0 : index
    %c0_0 = arith.constant 0 : index
    %0 = vector.load %arg1[%c0, %c0_0] : memref<16x32xf32, #tpu.memory_space<vmem>>, vector<16x32xf32>
    %c0_1 = arith.constant 0 : index
    %c0_2 = arith.constant 0 : index
    %1 = vector.load %arg2[%c0_1, %c0_2] : memref<32x384xf32, #tpu.memory_space<vmem>>, vector<32x384xf32>
    %cst = arith.constant dense<0.000000e+00> : vector<16x384xf32>
    %2 = tpu.matmul %0, %1, %cst {dimension_numbers = #tpu.dot_dimension_numbers<[1], [0], [0], [1], [0, 0, 1, 1], [], []>} : vector<16x32xf32>, vector<32x384xf32>, vector<16x384xf32> -> vector<16x384xf32>
    %c0_3 = arith.constant 0 : index
    %c0_4 = arith.constant 0 : index
    %3 = vector.load %arg3[%c0_3, %c0_4] : memref<1x384xf32, #tpu.memory_space<vmem>>, vector<1x384xf32>
    %4 = vector.broadcast %3 : vector<1x384xf32> to vector<16x384xf32>
    %5 = arith.addf %2, %4 : vector<16x384xf32>
    %6 = vector.extract_strided_slice %5 {offsets = [0, 0], sizes = [16, 128], strides = [1, 1]} : vector<16x384xf32> to vector<16x128xf32>
    %7 = vector.extract_strided_slice %5 {offsets = [0, 128], sizes = [16, 128], strides = [1, 1]} : vector<16x384xf32> to vector<16x128xf32>
    %8 = vector.extract_strided_slice %5 {offsets = [0, 256], sizes = [16, 128], strides = [1, 1]} : vector<16x384xf32> to vector<16x128xf32>
    %9 = arith.negf %8 : vector<16x128xf32>
    %10 = math.exp %9 : vector<16x128xf32>
    %cst_5 = arith.constant 1.000000e+00 : f32
    %11 = vector.broadcast %cst_5 : f32 to vector<16x128xf32>
    %12 = arith.addf %11, %10 : vector<16x128xf32>
    %13 = arith.divf %11, %12 : vector<16x128xf32>
    %14 = arith.subf %6, %7 : vector<16x128xf32>
    %15 = arith.mulf %13, %14 : vector<16x128xf32>
    %16 = arith.addf %7, %15 : vector<16x128xf32>
    %17 = vector.extract_strided_slice %16 {offsets = [0, 0], sizes = [16, 32], strides = [1, 1]} : vector<16x128xf32> to vector<16x32xf32>
    %c0_6 = arith.constant 0 : index
    %c0_7 = arith.constant 0 : index
    %18 = vector.load %arg4[%c0_6, %c0_7] : memref<16x32xf32, #tpu.memory_space<vmem>>, vector<16x32xf32>
    tpu.vector_store %arg4[%c0_6, %c0_7], %17 {strides = array<i32>} : memref<16x32xf32, #tpu.memory_space<vmem>>, vector<16x32xf32>,
    %19 = vector.extract_strided_slice %13 {offsets = [0, 0], sizes = [16, 32], strides = [1, 1]} : vector<16x128xf32> to vector<16x32xf32>
    %c0_8 = arith.constant 0 : index
    %c0_9 = arith.constant 0 : index
    %20 = vector.load %arg5[%c0_8, %c0_9] : memref<16x32xf32, #tpu.memory_space<vmem>>, vector<16x32xf32>
    tpu.vector_store %arg5[%c0_8, %c0_9], %19 {strides = array<i32>} : memref<16x32xf32, #tpu.memory_space<vmem>>, vector<16x32xf32>,
    return
  }
  func.func @transform_0(%arg0: i32) -> (i32, i32) {
    %c0_i32 = arith.constant 0 : i32
    %c0_i32_0 = arith.constant 0 : i32
    return %arg0, %c0_i32 : i32, i32
  }
  func.func @transform_1(%arg0: i32) -> (i32, i32) {
    %c0_i32 = arith.constant 0 : i32
    %c0_i32_0 = arith.constant 0 : i32
    %c0_i32_1 = arith.constant 0 : i32
    return %c0_i32, %c0_i32_0 : i32, i32
  }
  func.func @transform_2(%arg0: i32) -> (i32, i32) {
    %c0_i32 = arith.constant 0 : i32
    %c0_i32_0 = arith.constant 0 : i32
    %c0_i32_1 = arith.constant 0 : i32
    return %c0_i32, %c0_i32_0 : i32, i32
  }
  func.func @transform_3(%arg0: i32) -> (i32, i32) {
    %c0_i32 = arith.constant 0 : i32
    %c0_i32_0 = arith.constant 0 : i32
    return %arg0, %c0_i32 : i32, i32
  }
  func.func @transform_4(%arg0: i32) -> (i32, i32) {
    %c0_i32 = arith.constant 0 : i32
    %c0_i32_0 = arith.constant 0 : i32
    return %arg0, %c0_i32 : i32, i32
  }
}

</mosaic_0001>

<llo_original>
// kernel: _forward_folded.1
$region0: #{_forward_folded.1}
  #allocation0 [shape = 'u32[]', space=smem, size = 0x4, offset = 0x4, fixed_abs, tag = 'smem constant byte address 0x4 - core index']
  #allocation1 [shape = 'u32[144,128]{1,0:T(1,128)}', space=vmem, size = 0x12000, scoped, tag = 'internal scratch']
  %s0 = inlined_call_operand.hbm [shape: f32[24,32], index: 0, kind: input, shape index: {}]
  %s1 = inlined_call_operand.hbm [shape: f32[32,384], index: 1, kind: input, shape index: {}]
  %s2 = inlined_call_operand.vmem [shape: f32[1,384], index: 2, kind: input, shape index: {}]
  %s3 = inlined_call_operand.hbm [shape: f32[24,32], index: 3, kind: output, shape index: {0}]
  %s4 = inlined_call_operand.hbm [shape: f32[24,32], index: 4, kind: output, shape index: {1}]
  %5 = xla_tuple %s3, %s4
  %s6 = sld [smem:[#allocation0]]
  $region61: #{_forward_folded.1} parent=0
    _
  %s8 = ssub.s32 1, %s6
  %s9 = scalar_select 0, %s8, %s6
  $region1: #{_forward_folded.1} parent=0
    #allocation2 [shape = 'u8[16384]{0}', space=vmem, size = 0x4000, scoped, tag = 'input window, operand 0']
    #allocation3 [shape = 's32[2]{0}', space=sflag, size = 0x8, scoped, tag = 'scoped memory for _forward_folded.1']
    #allocation4 [shape = 's32[2]{0}', space=sflag, size = 0x8, scoped, tag = 'scoped memory for _forward_folded.1']
    #allocation5 [shape = 'u8[49152]{0}', space=vmem, size = 0xc000, scoped, tag = 'input window, operand 1, single buffered']
    #allocation6 [shape = 's32[1]{0}', space=sflag, size = 0x4, scoped, tag = 'scoped memory for _forward_folded.1']
    #allocation7 [shape = 'u8[16384]{0}', space=vmem, size = 0x4000, scoped, tag = 'output window, operand 0']
    #allocation8 [shape = 'u8[16384]{0}', space=vmem, size = 0x4000, scoped, tag = 'output window, operand 1']
    #allocation9 [shape = 's32[2]{0}', space=sflag, size = 0x8, scoped, tag = 'scoped memory for _forward_folded.1']
    %10 = vsyncpa [#allocation3], 0
    %s11 = scalar_lea.sflag [#allocation3], 1
    %12 = vsyncpa %s11, 0
    %13 = vsyncpa [#allocation6], 0
    %14 = vsyncpa [#allocation4], 0
    %s15 = scalar_lea.sflag [#allocation4], 1
    %16 = vsyncpa %s15, 0
    %17 = vsyncpa [#allocation9], 0
    %s18 = scalar_lea.sflag [#allocation9], 1
    %19 = vsyncpa %s18, 0
    loop: start=0, step=1, limit=4
    $region2: #{_forward_folded.1} parent=1 // loop_pre_header
      _
    $region3: #{_forward_folded.1} parent=1 // loop_header
      %s21 = sphi 0, %s25
      %p22 = scmp.ge.s32.totalorder %s21, 4
      %s31 = sphi 0, %s33
      %s34 = sphi 0, %s31
      %s35 = sphi 0, %s34
      %s51 = sphi 0, %s35
      %s55 = sphi 0, %s55
      %s57 = sphi 0, %s55
      %s58 = sphi 0, %s57
      %s72 = sphi 0, %s58
      %s76 = sphi 0, %s76
      %s78 = sphi 0, %s76
      %s79 = sphi 0, %s78
      %s93 = sphi 0, %s79
      %s99 = sphi 0, %s101
      %s102 = sphi 0, %s99
      %s103 = sphi 0, %s102
      %s119 = sphi 0, %s103
      %s125 = sphi 0, %s127
      %s128 = sphi 0, %s125
      %s129 = sphi 0, %s128
      %s145 = sphi 0, %s129
    $region4: #{_forward_folded.1} parent=1 // loop_header_branch
      %24 = sbr.rel (%p22) target = $region8
    $region5: #{_forward_folded.1} parent=1 // loop_body
      %s26 = ssub.s32 %s21, 1
      %s27 = ssub.s32 %s21, 2
      %s28 = sadd.s32 %s21, 1
      %s29 = ssub.s32 %s21, %s28
      %p30 = scmp.eq.s32.totalorder %s29, 0
      %s32 = sadd.s32 %s31, 1
      %s33 = scalar_select %p30, %s31, %s32
      %p36 = pneg %p30
      %p37 = scmp.eq.s32.totalorder %s21, 1
      %p38 = por %p36, %p37
      %p39 = scmp.ne.s32.totalorder %s31, %s34
      %p40 = scmp.eq.s32.totalorder %s21, 0
      %p41 = por %p39, %p40
      %p42 = scmp.ne.s32.totalorder %s31, %s34
      %p43 = scmp.eq.s32.totalorder %s26, 1
      %p44 = por %p42, %p43
      %p45 = scmp.ne.s32.totalorder %s34, %s35
      %p46 = scmp.eq.s32.totalorder %s26, 0
      %p47 = por %p45, %p46
      %p48 = scmp.ne.s32.totalorder %s34, %s35
      %p49 = scmp.eq.s32.totalorder %s27, 1
      %p50 = por %p48, %p49
      %p52 = scmp.ne.s32.totalorder %s35, %s51
      %p53 = scmp.eq.s32.totalorder %s27, 0
      %p54 = por %p52, %p53
      %s56 = sadd.s32 %s55, 1
      %p59 = scmp.eq.s32.totalorder %s21, 1
      %p60 = scmp.ne.s32.totalorder %s55, %s57
      %p61 = scmp.eq.s32.totalorder %s21, 0
      %p62 = por %p60, %p61
      %p63 = scmp.ne.s32.totalorder %s55, %s57
      %p64 = scmp.eq.s32.totalorder %s26, 1
      %p65 = por %p63, %p64
      %p66 = scmp.ne.s32.totalorder %s57, %s58
      %p67 = scmp.eq.s32.totalorder %s26, 0
      %p68 = por %p66, %p67
      %p69 = scmp.ne.s32.totalorder %s57, %s58
      %p70 = scmp.eq.s32.totalorder %s27, 1
      %p71 = por %p69, %p70
      %p73 = scmp.ne.s32.totalorder %s58, %s72
      %p74 = scmp.eq.s32.totalorder %s27, 0
      %p75 = por %p73, %p74
      %s77 = sadd.s32 %s76, 1
      %p80 = scmp.eq.s32.totalorder %s21, 1
      %p81 = scmp.ne.s32.totalorder %s76, %s78
      %p82 = scmp.eq.s32.totalorder %s21, 0
      %p83 = por %p81, %p82
      %p84 = scmp.ne.s32.totalorder %s76, %s78
      %p85 = scmp.eq.s32.totalorder %s26, 1
      %p86 = por %p84, %p85
      %p87 = scmp.ne.s32.totalorder %s78, %s79
      %p88 = scmp.eq.s32.totalorder %s26, 0
      %p89 = por %p87, %p88
      %p90 = scmp.ne.s32.totalorder %s78, %s79
      %p91 = scmp.eq.s32.totalorder %s27, 1
      %p92 = por %p90, %p91
      %p94 = scmp.ne.s32.totalorder %s79, %s93
      %p95 = scmp.eq.s32.totalorder %s27, 0
      %p96 = por %p94, %p95
      %s97 = ssub.s32 %s21, %s28
      %p98 = scmp.eq.s32.totalorder %s97, 0
      %s100 = sadd.s32 %s99, 1
      %s101 = scalar_select %p98, %s99, %s100
      %p104 = pneg %p98
      %p105 = scmp.eq.s32.totalorder %s21, 1
      %p106 = por %p104, %p105
      %p107 = scmp.ne.s32.totalorder %s99, %s102
      %p108 = scmp.eq.s32.totalorder %s21, 0
      %p109 = por %p107, %p108
      %p110 = scmp.ne.s32.totalorder %s99, %s102
      %p111 = scmp.eq.s32.totalorder %s26, 1
      %p112 = por %p110, %p111
      %p113 = scmp.ne.s32.totalorder %s102, %s103
      %p114 = scmp.eq.s32.totalorder %s26, 0
      %p115 = por %p113, %p114
      %p116 = scmp.ne.s32.totalorder %s102, %s103
      %p117 = scmp.eq.s32.totalorder %s27, 1
      %p118 = por %p116, %p117
      %p120 = scmp.ne.s32.totalorder %s103, %s119
      %p121 = scmp.eq.s32.totalorder %s27, 0
      %p122 = por %p120, %p121
      %s123 = ssub.s32 %s21, %s28
      %p124 = scmp.eq.s32.totalorder %s123, 0
      %s126 = sadd.s32 %s125, 1
      %s127 = scalar_select %p124, %s125, %s126
      %p130 = pneg %p124
      %p131 = scmp.eq.s32.totalorder %s21, 1
      %p132 = por %p130, %p131
      %p133 = scmp.ne.s32.totalorder %s125, %s128
      %p134 = scmp.eq.s32.totalorder %s21, 0
      %p135 = por %p133, %p134
      %p136 = scmp.ne.s32.totalorder %s125, %s128
      %p137 = scmp.eq.s32.totalorder %s26, 1
      %p138 = por %p136, %p137
      %p139 = scmp.ne.s32.totalorder %s128, %s129
      %p140 = scmp.eq.s32.totalorder %s26, 0
      %p141 = por %p139, %p140
      %p142 = scmp.ne.s32.totalorder %s128, %s129
      %p143 = scmp.eq.s32.totalorder %s27, 1
      %p144 = por %p142, %p143
      %p146 = scmp.ne.s32.totalorder %s129, %s145
      %p147 = scmp.eq.s32.totalorder %s27, 0
      %p148 = por %p146, %p147
      %p149 = scmp.le.s32.totalorder 1, %s21
      %p150 = scmp.lt.s32.totalorder %s21, 3
      %p151 = pnand %p149, %p150
      %p152 = pneg %p151
      // Predicated region
      $region9: #{_forward_folded.1} parent=5 // pred_check
        _
      $region10: #{_forward_folded.1} parent=5 // pred_check_branch
        %154 = sbr.rel (%p151) target = $region12
      $region11: #{_forward_folded.1} parent=5 // pred_region
        %s155 = ssub.s32 %s21, 1
        // Predicated region
        $region13: #{_forward_folded.1} parent=11 // pred_check
          %p156 = pneg %p68
        $region14: #{_forward_folded.1} parent=11 // pred_check_branch
          %158 = sbr.rel (%p156) target = $region16
        $region15: #{_forward_folded.1} parent=11 // pred_region
          %s160 = ssub.s32 1536, 1536
          %161 = vsyncadd [#allocation6], %s160
          %s162 = sshll.u32 [#allocation5], 4
          %s163 = int_to_ptr.vmem [resolvable:$true] %s162
          %168 = dma.hbm_to_vmem [thread:$0]  %s1, 1536, %s163, [#allocation6], 384, 384, 24
        $region16: #{_forward_folded.1} parent=11 // pred_fallthru
          _
        // Predicated region
        $region17: #{_forward_folded.1} parent=11 // pred_check
          %p169 = pneg %p89
        $region18: #{_forward_folded.1} parent=11 // pred_check_branch
          %171 = sbr.rel (%p169) target = $region20
        $region19: #{_forward_folded.1} parent=11 // pred_region
          _
        $region20: #{_forward_folded.1} parent=11 // pred_fallthru
          _
      $region12: #{_forward_folded.1} parent=5 // pred_fallthru
        _
      %p172 = scmp.lt.s32.totalorder %s21, 2
      // Predicated region
      $region21: #{_forward_folded.1} parent=5 // pred_check
        %p173 = pneg %p172
      $region22: #{_forward_folded.1} parent=5 // pred_check_branch
        %175 = sbr.rel (%p173) target = $region24
      $region23: #{_forward_folded.1} parent=5 // pred_region
        // Predicated region
        $region25: #{_forward_folded.1} parent=23 // pred_check
          %p176 = pneg %p41
        $region26: #{_forward_folded.1} parent=23 // pred_check_branch
          %178 = sbr.rel (%p176) target = $region28
        $region27: #{_forward_folded.1} parent=23 // pred_region
          %s179 = sand.u32 %s31, 1
          %s180 = scalar_lea.sflag [#allocation3], %s179
          %s181 = sand.u32 %s31, 1
          %s182 = smul.addr %s181, 16
          %s183 = scalar_lea.vmem [#allocation2], %s182
          %s184 = smul.u32 2, %s21
          %s185 = ssub.s32 3, %s184
          %p186 = scmp.lt.s32.totalorder %s185, 2
          %s187 = scalar_select %p186, %s185, 2
          %s188 = smul.u32 128, %s187
          %s190 = ssub.s32 256, %s188
          %191 = vsyncadd %s180, %s190
          %p192 = scmp.ne.s32.totalorder 0, %s188
          %s193 = smul.addr %s184, 128
          %s194 = scalar_lea.hbm %s0, %s193
          %s195 = smul.u32 8, %s187
          %s196 = sshll.u32 %s183, 4
          %s197 = int_to_ptr.vmem [resolvable:$true] %s196
          %s198 = sshll.u32 %s195, 4
          %202 = dma.hbm_to_vmem [thread:$0]  (%p192), %s194, %s198, %s197, %s180, 128, 128, 8
        $region28: #{_forward_folded.1} parent=23 // pred_fallthru
          _
      $region24: #{_forward_folded.1} parent=5 // pred_fallthru
        _
      %p203 = scmp.le.s32.totalorder 1, %s21
      %p204 = scmp.lt.s32.totalorder %s21, 3
      %p205 = pnand %p203, %p204
      %p206 = pneg %p205
      // Predicated region
      $region29: #{_forward_folded.1} parent=5 // pred_check
        _
      $region30: #{_forward_folded.1} parent=5 // pred_check_branch
        %208 = sbr.rel (%p205) target = $region32
      $region31: #{_forward_folded.1} parent=5 // pred_region
        %s209 = ssub.s32 %s21, 1
        %s210 = sand.u32 %s34, 1
        %s211 = scalar_lea.sflag [#allocation3], %s210
        %s212 = sand.u32 %s34, 1
        %s213 = smul.addr %s212, 16
        %s214 = scalar_lea.vmem [#allocation2], %s213
        // Predicated region
        $region33: #{_forward_folded.1} parent=31 // pred_check
          %p215 = pneg %p47
        $region34: #{_forward_folded.1} parent=31 // pred_check_branch
          %217 = sbr.rel (%p215) target = $region36
        $region35: #{_forward_folded.1} parent=31 // pred_region
          %218 = dma.done %s211, 256
        $region36: #{_forward_folded.1} parent=31 // pred_fallthru
          _
        // Predicated region
        $region37: #{_forward_folded.1} parent=31 // pred_check
          %p219 = pneg %p68
        $region38: #{_forward_folded.1} parent=31 // pred_check_branch
          %221 = sbr.rel (%p219) target = $region40
        $region39: #{_forward_folded.1} parent=31 // pred_region
          %222 = dma.done [#allocation6], 1536
        $region40: #{_forward_folded.1} parent=31 // pred_fallthru
          _
        %s223 = sand.u32 %s34, 1
        %s224 = scalar_lea.sflag [#allocation3], %s223
        %s225 = sand.u32 %s34, 1
        %s226 = smul.addr %s225, 16
        %s227 = scalar_lea.vmem [#allocation2], %s226
        %p228 = pneg %p47
        %p229 = pneg %p44
        %p230 = pneg %p68
        %p231 = pneg %p65
        %p232 = pneg %p89
        %p233 = pneg %p86
        %p234 = pneg %p115
        %p235 = pneg %p112
        %s236 = sand.u32 %s102, 1
        %s237 = scalar_lea.sflag [#allocation4], %s236
        %s238 = sand.u32 %s102, 1
        %s239 = smul.addr %s238, 16
        %s240 = scalar_lea.vmem [#allocation7], %s239
        %p241 = pneg %p141
        %p242 = pneg %p138
        %s243 = sand.u32 %s128, 1
        %s244 = scalar_lea.sflag [#allocation9], %s243
        %s245 = sand.u32 %s128, 1
        %s246 = smul.addr %s245, 16
        %s247 = scalar_lea.vmem [#allocation8], %s246
        %s248 = smul.u32 2, %s26
        %s249 = ssub.s32 3, %s248
        %p250 = scmp.lt.s32.totalorder %s249, 2
        %s251 = scalar_select %p250, %s249, 2
        %s252 = smul.u32 128, %s251
        %s253 = smul.u32 2, %s26
        %s254 = ssub.s32 3, %s253
        %p255 = scmp.lt.s32.totalorder %s254, 2
        %s256 = scalar_select %p255, %s254, 2
        %s257 = smul.u32 128, %s256
        %s258 = smul.u32 2, %s26
        %s259 = ssub.s32 3, %s258
        %p260 = scmp.lt.s32.totalorder %s259, 2
        %s261 = scalar_select %p260, %s259, 2
        %s262 = smul.u32 128, %s261
        %v263 = vld [vmem:[%s214] sm:$0xff]
        %v264 = vld [vmem:[%s214 + $0x8] sm:$0xff]
        %v265 = vld [vmem:[#allocation5] sm:$0xff]
        %v266 = vld [vmem:[#allocation5 + $0x8] sm:$0xff]
        %v267 = vld [vmem:[#allocation5 + $0x10] sm:$0xff]
        %v268 = vld [vmem:[#allocation5 + $0x18] sm:$0xff]
        %v269 = vld [vmem:[#allocation5 + $0x20] sm:$0xff]
        %v270 = vld [vmem:[#allocation5 + $0x28] sm:$0xff]
        %v271 = vld [vmem:[#allocation5 + $0x30] sm:$0xff]
        %v272 = vld [vmem:[#allocation5 + $0x38] sm:$0xff]
        %v273 = vld [vmem:[#allocation5 + $0x40] sm:$0xff]
        %v274 = vld [vmem:[#allocation5 + $0x48] sm:$0xff]
        %v275 = vld [vmem:[#allocation5 + $0x50] sm:$0xff]
        %v276 = vld [vmem:[#allocation5 + $0x58] sm:$0xff]
        %v277 = vld [vmem:[%s2] sm:$0x7]
        %v279 = vlaneseq
        %v280 = vshrl.u32 %v279, 7
        %v281 = vsub.s32 0, %v280
        %v282 = vrot.slane %v277, %v281
        %v283 = vlaneseq
        %v284 = vshrl.u32 %v283, 7
        %v285 = vsub.s32 1, %v284
        %v286 = vrot.slane %v277, %v285
        %v287 = vlaneseq
        %v288 = vshrl.u32 %v287, 7
        %v289 = vsub.s32 2, %v288
        %v290 = vrot.slane %v277, %v289
        %vm294 = vcmask 261120
        %v296 = vsel %vm294, %v263, 0
        %v299 = vsel %vm294, %v264, 0
        %301 = vmatprep.subr.mxu0 0.0
        %302 = vmatpush1.msra.mxu0 0.0
        %303 = vmatprep.subr.mxu0 0.0
        %304 = vmatpush1.msra.mxu0 0.0
        %305 = vmatprep.subr.mxu0 0.0
        %306 = vmatpush1.msra.mxu0 0.0
        %307 = vmatprep.subr.mxu0 0.0
        %308 = vmatpush1.msra.mxu0 0.0
        %309 = vmatprep.subr.mxu0 0.0
        %310 = vmatpush1.msra.mxu0 0.0
        %311 = vmatprep.subr.mxu0 0.0
        %312 = vmatpush1.msra.mxu0 0.0
        %313 = vmatprep.subr.mxu0 0.0
        %314 = vmatpush1.msra.mxu0 0.0
        %315 = vmatprep.subr.mxu0 0.0
        %316 = vmatpush1.msra.mxu0 0.0
        %317 = vmatprep.subr.mxu0 0.0
        %318 = vmatpush1.msra.mxu0 0.0
        %319 = vmatprep.subr.mxu0 0.0
        %320 = vmatpush1.msra.mxu0 0.0
        %321 = vmatprep.subr.mxu0 0.0
        %322 = vmatpush1.msra.mxu0 0.0
        %323 = vmatprep.subr.mxu0 0.0
        %324 = vmatpush1.msra.mxu0 0.0
        %325 = vmatprep.subr.mxu0 %v275
        %326 = vmatpush1.msra.mxu0 %v274
        %327 = vmatprep.subr.mxu0 %v272
        %328 = vmatpush1.msra.mxu0 %v271
        %329 = vmatprep.subr.mxu0 %v269
        %330 = vmatpush1.msra.mxu0 %v268
        %331 = vmatprep.subr.mxu0 %v266
        %332 = vmatpush1.msra.mxu0 %v265
        %333 = vmatprep.subr.mxu0 0.0
        %334 = vmatpush2.msra.mxu0 0.0
        %335 = vmatprep.subr.mxu0 0.0
        %336 = vmatpush2.msra.mxu0 0.0
        %337 = vmatprep.subr.mxu0 0.0
        %338 = vmatpush2.msra.mxu0 0.0
        %339 = vmatprep.subr.mxu0 0.0
        %340 = vmatpush2.msra.mxu0 0.0
        %341 = vmatprep.subr.mxu0 0.0
        %342 = vmatpush2.msra.mxu0 0.0
        %343 = vmatprep.subr.mxu0 0.0
        %344 = vmatpush2.msra.mxu0 0.0
        %345 = vmatprep.subr.mxu0 0.0
        %346 = vmatpush2.msra.mxu0 0.0
        %347 = vmatprep.subr.mxu0 0.0
        %348 = vmatpush2.msra.mxu0 0.0
        %349 = vmatprep.subr.mxu0 0.0
        %350 = vmatpush2.msra.mxu0 0.0
        %351 = vmatprep.subr.mxu0 0.0
        %352 = vmatpush2.msra.mxu0 0.0
        %353 = vmatprep.subr.mxu0 0.0
        %354 = vmatpush2.msra.mxu0 0.0
        %355 = vmatprep.subr.mxu0 0.0
        %356 = vmatpush2.msra.mxu0 0.0
        %357 = vmatprep.subr.mxu0 0.0
        %358 = vmatpush2.msra.mxu0 0.0
        %359 = vmatprep.subr.mxu0 0.0
        %360 = vmatpush2.msra.mxu0 0.0
        %361 = vmatprep.subr.mxu0 0.0
        %362 = vmatpush2.msra.mxu0 0.0
        %363 = vmatprep.subr.mxu0 0.0
        %364 = vmatpush2.msra.mxu0 0.0
        %365 = vmatprep.mubr.f32.mxu0 0.0
        %366 = vmatmul.mubr.f32.gmra.mxu0 %v296
        %v367 = vpop.f32.mrf.mxu0
        %v368 = vadd.f32 %v282, %v367
        %v369 = vpop.f32.mrf.mxu0
        %v370 = vadd.f32 %v286, %v369
        %371 = vmatprep.mubr.f32.mxu0 0.0
        %372 = vmatmul.mubr.f32.gmra.mxu0 %v299
        %v373 = vpop.f32.mrf.mxu0
        %v374 = vadd.f32 %v282, %v373
        %v375 = vpop.f32.mrf.mxu0
        %v376 = vadd.f32 %v286, %v375
        %377 = vdwg.mxu0
        %378 = vmatprep.subr.mxu0 0.0
        %379 = vmatpush1.msra.mxu0 0.0
        %380 = vmatprep.subr.mxu0 0.0
        %381 = vmatpush1.msra.mxu0 0.0
        %382 = vmatprep.subr.mxu0 0.0
        %383 = vmatpush1.msra.mxu0 0.0
        %384 = vmatprep.subr.mxu0 0.0
        %385 = vmatpush1.msra.mxu0 0.0
        %386 = vmatprep.subr.mxu0 0.0
        %387 = vmatpush1.msra.mxu0 0.0
        %388 = vmatprep.subr.mxu0 0.0
        %389 = vmatpush1.msra.mxu0 0.0
        %390 = vmatprep.subr.mxu0 0.0
        %391 = vmatpush1.msra.mxu0 0.0
        %392 = vmatprep.subr.mxu0 0.0
        %393 = vmatpush1.msra.mxu0 0.0
        %394 = vmatprep.subr.mxu0 0.0
        %395 = vmatpush1.msra.mxu0 0.0
        %396 = vmatprep.subr.mxu0 0.0
        %397 = vmatpush1.msra.mxu0 0.0
        %398 = vmatprep.subr.mxu0 0.0
        %399 = vmatpush1.msra.mxu0 0.0
        %400 = vmatprep.subr.mxu0 0.0
        %401 = vmatpush1.msra.mxu0 0.0
        %402 = vmatprep.subr.mxu0 0.0
        %403 = vmatpush1.msra.mxu0 %v276
        %404 = vmatprep.subr.mxu0 0.0
        %405 = vmatpush1.msra.mxu0 %v273
        %406 = vmatprep.subr.mxu0 0.0
        %407 = vmatpush1.msra.mxu0 %v270
        %408 = vmatprep.subr.mxu0 0.0
        %409 = vmatpush1.msra.mxu0 %v267
        %410 = vmatprep.subr.mxu0 0.0
        %411 = vmatpush2.msra.mxu0 0.0
        %412 = vmatprep.subr.mxu0 0.0
        %413 = vmatpush2.msra.mxu0 0.0
        %414 = vmatprep.subr.mxu0 0.0
        %415 = vmatpush2.msra.mxu0 0.0
        %416 = vmatprep.subr.mxu0 0.0
        %417 = vmatpush2.msra.mxu0 0.0
        %418 = vmatprep.subr.mxu0 0.0
        %419 = vmatpush2.msra.mxu0 0.0
        %420 = vmatprep.subr.mxu0 0.0
        %421 = vmatpush2.msra.mxu0 0.0
        %422 = vmatprep.subr.mxu0 0.0
        %423 = vmatpush2.msra.mxu0 0.0
        %424 = vmatprep.subr.mxu0 0.0
        %425 = vmatpush2.msra.mxu0 0.0
        %426 = vmatprep.subr.mxu0 0.0
        %427 = vmatpush2.msra.mxu0 0.0
        %428 = vmatprep.subr.mxu0 0.0
        %429 = vmatpush2.msra.mxu0 0.0
        %430 = vmatprep.subr.mxu0 0.0
        %431 = vmatpush2.msra.mxu0 0.0
        %432 = vmatprep.subr.mxu0 0.0
        %433 = vmatpush2.msra.mxu0 0.0
        %434 = vmatprep.subr.mxu0 0.0
        %435 = vmatpush2.msra.mxu0 0.0
        %436 = vmatprep.subr.mxu0 0.0
        %437 = vmatpush2.msra.mxu0 0.0
        %438 = vmatprep.subr.mxu0 0.0
        %439 = vmatpush2.msra.mxu0 0.0
        %440 = vmatprep.subr.mxu0 0.0
        %441 = vmatpush2.msra.mxu0 0.0
        %442 = vmatprep.mubr.f32.mxu0 0.0
        %443 = vmatmul.mubr.f32.gmra.mxu0 %v296
        %v444 = vpop.f32.mrf.mxu0
        %v445 = vadd.f32 %v290, %v444
        %v446 = vpop.f32.mrf.mxu0
        %447 = vmatprep.mubr.f32.mxu0 0.0
        %448 = vmatmul.mubr.f32.gmra.mxu0 %v299
        %v449 = vpop.f32.mrf.mxu0
        %v450 = vadd.f32 %v290, %v449
        %v451 = vpop.f32.mrf.mxu0
        %452 = vdwg.mxu0
        %v453 = vxor.u32 %v445, 2147483648
        %v454 = vxor.u32 %v450, 2147483648
        %v455 = vmul.f32 %v453, 1.442695
        %v456 = vpow.pop %v455
        %v457 = vmul.f32 %v454, 1.442695
        %v458 = vpow.pop %v457
        %v459 = vadd.f32 %v456, 1.0
        %v460 = vadd.f32 %v458, 1.0
        %v461 = vrcp.pop %v459
        %v462 = vmul.f32 1.0, %v461
        %v463 = vrcp.pop %v460
        %v464 = vmul.f32 1.0, %v463
        %v465 = vsub.f32 %v368, %v370
        %v466 = vsub.f32 %v374, %v376
        %v467 = vmul.f32 %v462, %v465
        %v468 = vmul.f32 %v464, %v466
        %v469 = vadd.f32 %v370, %v467
        %v470 = vadd.f32 %v376, %v468
        %471 = vst.msk [vmem:[%s240] sm:$0xff] %vm294, %v469
        %472 = vst.msk [vmem:[%s240 + $0x8] sm:$0xff] %vm294, %v470
        %473 = vst.msk [vmem:[%s247] sm:$0xff] %vm294, %v462
        %474 = vst.msk [vmem:[%s247 + $0x8] sm:$0xff] %vm294, %v464
        %s475 = sand.u32 %s102, 1
        %s476 = scalar_lea.sflag [#allocation4], %s475
        %s477 = sand.u32 %s102, 1
        %s478 = smul.addr %s477, 16
        %s479 = scalar_lea.vmem [#allocation7], %s478
        %s480 = sand.u32 %s128, 1
        %s481 = scalar_lea.sflag [#allocation9], %s480
        %s482 = sand.u32 %s128, 1
        %s483 = smul.addr %s482, 16
        %s484 = scalar_lea.vmem [#allocation8], %s483
        // Predicated region
        $region41: #{_forward_folded.1} parent=31 // pred_check
          %p485 = pneg %p112
        $region42: #{_forward_folded.1} parent=31 // pred_check_branch
          %487 = sbr.rel (%p485) target = $region44
        $region43: #{_forward_folded.1} parent=31 // pred_region
          %s488 = smul.u32 2, %s26
          %s489 = ssub.s32 3, %s488
          %p490 = scmp.lt.s32.totalorder %s489, 2
          %s491 = scalar_select %p490, %s489, 2
          %s492 = smul.u32 128, %s491
          %s494 = ssub.s32 256, %s492
          %495 = vsyncadd %s476, %s494
          %p496 = scmp.ne.s32.totalorder 0, %s492
          %s497 = smul.addr %s488, 128
          %s498 = scalar_lea.hbm %s3, %s497
          %s499 = smul.u32 8, %s491
          %s500 = sshll.u32 %s479, 4
          %s501 = int_to_ptr.vmem [resolvable:$true] %s500
          %s502 = sshll.u32 %s499, 4
          %506 = dma.vmem_to_hbm [thread:$0]  (%p496), %s501, %s502, %s498, %s476, 128, 128, 8
        $region44: #{_forward_folded.1} parent=31 // pred_fallthru
          _
        // Predicated region
        $region45: #{_forward_folded.1} parent=31 // pred_check
          %p507 = pneg %p138
        $region46: #{_forward_folded.1} parent=31 // pred_check_branch
          %509 = sbr.rel (%p507) target = $region48
        $region47: #{_forward_folded.1} parent=31 // pred_region
          %s510 = smul.u32 2, %s26
          %s511 = ssub.s32 3, %s510
          %p512 = scmp.lt.s32.totalorder %s511, 2
          %s513 = scalar_select %p512, %s511, 2
          %s514 = smul.u32 128, %s513
          %s516 = ssub.s32 256, %s514
          %517 = vsyncadd %s481, %s516
          %p518 = scmp.ne.s32.totalorder 0, %s514
          %s519 = smul.addr %s510, 128
          %s520 = scalar_lea.hbm %s4, %s519
          %s521 = smul.u32 8, %s513
          %s522 = sshll.u32 %s484, 4
          %s523 = int_to_ptr.vmem [resolvable:$true] %s522
          %s524 = sshll.u32 %s521, 4
          %528 = dma.vmem_to_hbm [thread:$0]  (%p518), %s523, %s524, %s520, %s481, 128, 128, 8
        $region48: #{_forward_folded.1} parent=31 // pred_fallthru
          _
      $region32: #{_forward_folded.1} parent=5 // pred_fallthru
        _
      %p529 = scmp.le.s32.totalorder 2, %s21
      // Predicated region
      $region49: #{_forward_folded.1} parent=5 // pred_check
        %p530 = pneg %p529
      $region50: #{_forward_folded.1} parent=5 // pred_check_branch
        %532 = sbr.rel (%p530) target = $region52
      $region51: #{_forward_folded.1} parent=5 // pred_region
        %s533 = ssub.s32 %s21, 2
        // Predicated region
        $region53: #{_forward_folded.1} parent=51 // pred_check
          %p534 = pneg %p118
        $region54: #{_forward_folded.1} parent=51 // pred_check_branch
          %536 = sbr.rel (%p534) target = $region56
        $region55: #{_forward_folded.1} parent=51 // pred_region
          %s537 = sand.u32 %s103, 1
          %s538 = scalar_lea.sflag [#allocation4], %s537
          %s539 = sand.u32 %s103, 1
          %s540 = smul.addr %s539, 16
          %s541 = scalar_lea.vmem [#allocation7], %s540
          %542 = dma.done %s538, 256
        $region56: #{_forward_folded.1} parent=51 // pred_fallthru
          _
        // Predicated region
        $region57: #{_forward_folded.1} parent=51 // pred_check
          %p543 = pneg %p144
        $region58: #{_forward_folded.1} parent=51 // pred_check_branch
          %545 = sbr.rel (%p543) target = $region60
        $region59: #{_forward_folded.1} parent=51 // pred_region
          %s546 = sand.u32 %s129, 1
          %s547 = scalar_lea.sflag [#allocation9], %s546
          %s548 = sand.u32 %s129, 1
          %s549 = smul.addr %s548, 16
          %s550 = scalar_lea.vmem [#allocation8], %s549
          %551 = dma.done %s547, 256
        $region60: #{_forward_folded.1} parent=51 // pred_fallthru
          _
      $region52: #{_forward_folded.1} parent=5 // pred_fallthru
        _
    $region6: #{_forward_folded.1} parent=1 // loop_footer
      %s25 = sadd.s32 1, %s21
    $region7: #{_forward_folded.1} parent=1 // loop_footer_branch
      %20 = sbr.rel target = $region3
    $region8: #{_forward_folded.1} parent=1 // loop_exit
      _
    %552 = vsyncpa [#allocation3], 1
    %s553 = scalar_lea.sflag [#allocation3], 1
    %554 = vsyncpa %s553, 1
    %555 = vsyncpa [#allocation6], 1
    %556 = vsyncpa [#allocation4], 1
    %s557 = scalar_lea.sflag [#allocation4], 1
    %558 = vsyncpa %s557, 1
    %559 = vsyncpa [#allocation9], 1
    %s560 = scalar_lea.sflag [#allocation9], 1
    %561 = vsyncpa %s560, 1

// kernel: _forward_folded.1
$region0: #{_forward_folded.1}
  #allocation0 [shape = 'u32[]', space=smem, size = 0x4, offset = 0x4, fixed_abs, tag = 'smem constant byte address 0x4 - core index']
  #allocation1 [shape = 'u32[144,128]{1,0:T(1,128)}', space=vmem, size = 0x12000, scoped, tag = 'internal scratch']
  %s0 = inlined_call_operand.hbm [shape: f32[24,32], index: 0, kind: input, shape index: {}]
  %s1 = inlined_call_operand.hbm [shape: f32[32,384], index: 1, kind: input, shape index: {}]
  %s2 = inlined_call_operand.vmem [shape: f32[1,384], index: 2, kind: input, shape index: {}]
  %s3 = inlined_call_operand.hbm [shape: f32[24,32], index: 3, kind: output, shape index: {0}]
  %s4 = inlined_call_operand.hbm [shape: f32[24,32], index: 4, kind: output, shape index: {1}]
  %5 = xla_tuple %s3, %s4
  %s6 = sld [smem:[#allocation0]]
  $region61: #{_forward_folded.1} parent=0
    _
  %s8 = ssub.s32 1, %s6
  %s9 = scalar_select 0, %s8, %s6
  $region1: #{_forward_folded.1} parent=0
    #allocation2 [shape = 'u8[16384]{0}', space=vmem, size = 0x4000, scoped, tag = 'input window, operand 0']
    #allocation3 [shape = 's32[2]{0}', space=sflag, size = 0x8, scoped, tag = 'scoped memory for _forward_folded.1']
    #allocation4 [shape = 's32[2]{0}', space=sflag, size = 0x8, scoped, tag = 'scoped memory for _forward_folded.1']
    #allocation5 [shape = 'u8[49152]{0}', space=vmem, size = 0xc000, scoped, tag = 'input window, operand 1, single buffered']
    #allocation6 [shape = 's32[1]{0}', space=sflag, size = 0x4, scoped, tag = 'scoped memory for _forward_folded.1']
    #allocation7 [shape = 'u8[16384]{0}', space=vmem, size = 0x4000, scoped, tag = 'output window, operand 0']
    #allocation8 [shape = 'u8[16384]{0}', space=vmem, size = 0x4000, scoped, tag = 'output window, operand 1']
    #allocation9 [shape = 's32[2]{0}', space=sflag, size = 0x8, scoped, tag = 'scoped memory for _forward_folded.1']
    %10 = vsyncpa [#allocation3], 0
    %s11 = scalar_lea.sflag [#allocation3], 1
    %12 = vsyncpa %s11, 0
    %13 = vsyncpa [#allocation6], 0
    %14 = vsyncpa [#allocation4], 0
    %s15 = scalar_lea.sflag [#allocation4], 1
    %16 = vsyncpa %s15, 0
    %17 = vsyncpa [#allocation9], 0
    %s18 = scalar_lea.sflag [#allocation9], 1
    %19 = vsyncpa %s18, 0
    loop: start=0, step=1, limit=4
    $region2: #{_forward_folded.1} parent=1 // loop_pre_header
      _
    $region3: #{_forward_folded.1} parent=1 // loop_header
      %s21 = sphi 0, %s25
      %p22 = scmp.ge.s32.totalorder %s21, 4
      %s31 = sphi 0, %s33
      %s34 = sphi 0, %s31
      %s35 = sphi 0, %s34
      %s51 = sphi 0, %s35
      %s55 = sphi 0, %s55
      %s57 = sphi 0, %s55
      %s58 = sphi 0, %s57
      %s72 = sphi 0, %s58
      %s76 = sphi 0, %s76
      %s78 = sphi 0, %s76
      %s79 = sphi 0, %s78
      %s93 = sphi 0, %s79
      %s99 = sphi 0, %s101
      %s102 = sphi 0, %s99
      %s103 = sphi 0, %s102
      %s119 = sphi 0, %s103
      %s125 = sphi 0, %s127
      %s128 = sphi 0, %s125
      %s129 = sphi 0, %s128
      %s145 = sphi 0, %s129
    $region4: #{_forward_folded.1} parent=1 // loop_header_branch
      %24 = sbr.rel (%p22) target = $region8
    $region5: #{_forward_folded.1} parent=1 // loop_body
      %s26 = ssub.s32 %s21, 1
      %s27 = ssub.s32 %s21, 2
      %s28 = sadd.s32 %s21, 1
      %s29 = ssub.s32 %s21, %s28
      %p30 = scmp.eq.s32.totalorder %s29, 0
      %s32 = sadd.s32 %s31, 1
      %s33 = scalar_select %p30, %s31, %s32
      %p36 = pneg %p30
      %p37 = scmp.eq.s32.totalorder %s21, 1
      %p38 = por %p36, %p37
      %p39 = scmp.ne.s32.totalorder %s31, %s34
      %p40 = scmp.eq.s32.totalorder %s21, 0
      %p41 = por %p39, %p40
      %p42 = scmp.ne.s32.totalorder %s31, %s34
      %p43 = scmp.eq.s32.totalorder %s26, 1
      %p44 = por %p42, %p43
      %p45 = scmp.ne.s32.totalorder %s34, %s35
      %p46 = scmp.eq.s32.totalorder %s26, 0
      %p47 = por %p45, %p46
      %p48 = scmp.ne.s32.totalorder %s34, %s35
      %p49 = scmp.eq.s32.totalorder %s27, 1
      %p50 = por %p48, %p49
      %p52 = scmp.ne.s32.totalorder %s35, %s51
      %p53 = scmp.eq.s32.totalorder %s27, 0
      %p54 = por %p52, %p53
      %s56 = sadd.s32 %s55, 1
      %p59 = scmp.eq.s32.totalorder %s21, 1
      %p60 = scmp.ne.s32.totalorder %s55, %s57
      %p61 = scmp.eq.s32.totalorder %s21, 0
      %p62 = por %p60, %p61
      %p63 = scmp.ne.s32.totalorder %s55, %s57
      %p64 = scmp.eq.s32.totalorder %s26, 1
      %p65 = por %p63, %p64
      %p66 = scmp.ne.s32.totalorder %s57, %s58
      %p67 = scmp.eq.s32.totalorder %s26, 0
      %p68 = por %p66, %p67
      %p69 = scmp.ne.s32.totalorder %s57, %s58
      %p70 = scmp.eq.s32.totalorder %s27, 1
      %p71 = por %p69, %p70
      %p73 = scmp.ne.s32.totalorder %s58, %s72
      %p74 = scmp.eq.s32.totalorder %s27, 0
      %p75 = por %p73, %p74
      %s77 = sadd.s32 %s76, 1
      %p80 = scmp.eq.s32.totalorder %s21, 1
      %p81 = scmp.ne.s32.totalorder %s76, %s78
      %p82 = scmp.eq.s32.totalorder %s21, 0
      %p83 = por %p81, %p82
      %p84 = scmp.ne.s32.totalorder %s76, %s78
      %p85 = scmp.eq.s32.totalorder %s26, 1
      %p86 = por %p84, %p85
      %p87 = scmp.ne.s32.totalorder %s78, %s79
      %p88 = scmp.eq.s32.totalorder %s26, 0
      %p89 = por %p87, %p88
      %p90 = scmp.ne.s32.totalorder %s78, %s79
      %p91 = scmp.eq.s32.totalorder %s27, 1
      %p92 = por %p90, %p91
      %p94 = scmp.ne.s32.totalorder %s79, %s93
      %p95 = scmp.eq.s32.totalorder %s27, 0
      %p96 = por %p94, %p95
      %s97 = ssub.s32 %s21, %s28
      %p98 = scmp.eq.s32.totalorder %s97, 0
      %s100 = sadd.s32 %s99, 1
      %s101 = scalar_select %p98, %s99, %s100
      %p104 = pneg %p98
      %p105 = scmp.eq.s32.totalorder %s21, 1
      %p106 = por %p104, %p105
      %p107 = scmp.ne.s32.totalorder %s99, %s102
      %p108 = scmp.eq.s32.totalorder %s21, 0
      %p109 = por %p107, %p108
      %p110 = scmp.ne.s32.totalorder %s99, %s102
      %p111 = scmp.eq.s32.totalorder %s26, 1
      %p112 = por %p110, %p111
      %p113 = scmp.ne.s32.totalorder %s102, %s103
      %p114 = scmp.eq.s32.totalorder %s26, 0
      %p115 = por %p113, %p114
      %p116 = scmp.ne.s32.totalorder %s102, %s103
      %p117 = scmp.eq.s32.totalorder %s27, 1
      %p118 = por %p116, %p117
      %p120 = scmp.ne.s32.totalorder %s103, %s119
      %p121 = scmp.eq.s32.totalorder %s27, 0
      %p122 = por %p120, %p121
      %s123 = ssub.s32 %s21, %s28
      %p124 = scmp.eq.s32.totalorder %s123, 0
      %s126 = sadd.s32 %s125, 1
      %s127 = scalar_select %p124, %s125, %s126
      %p130 = pneg %p124
      %p131 = scmp.eq.s32.totalorder %s21, 1
      %p132 = por %p130, %p131
      %p133 = scmp.ne.s32.totalorder %s125, %s128
      %p134 = scmp.eq.s32.totalorder %s21, 0
      %p135 = por %p133, %p134
      %p136 = scmp.ne.s32.totalorder %s125, %s128
      %p137 = scmp.eq.s32.totalorder %s26, 1
      %p138 = por %p136, %p137
      %p139 = scmp.ne.s32.totalorder %s128, %s129
      %p140 = scmp.eq.s32.totalorder %s26, 0
      %p141 = por %p139, %p140
      %p142 = scmp.ne.s32.totalorder %s128, %s129
      %p143 = scmp.eq.s32.totalorder %s27, 1
      %p144 = por %p142, %p143
      %p146 = scmp.ne.s32.totalorder %s129, %s145
      %p147 = scmp.eq.s32.totalorder %s27, 0
      %p148 = por %p146, %p147
      %p149 = scmp.le.s32.totalorder 1, %s21
      %p150 = scmp.lt.s32.totalorder %s21, 3
      %p151 = pnand %p149, %p150
      %p152 = pneg %p151
      // Predicated region
      $region9: #{_forward_folded.1} parent=5 // pred_check
        _
      $region10: #{_forward_folded.1} parent=5 // pred_check_branch
        %154 = sbr.rel (%p151) target = $region12
      $region11: #{_forward_folded.1} parent=5 // pred_region
        %s155 = ssub.s32 %s21, 1
        // Predicated region
        $region13: #{_forward_folded.1} parent=11 // pred_check
          %p156 = pneg %p68
        $region14: #{_forward_folded.1} parent=11 // pred_check_branch
          %158 = sbr.rel (%p156) target = $region16
        $region15: #{_forward_folded.1} parent=11 // pred_region
          %s160 = ssub.s32 1536, 1536
          %161 = vsyncadd [#allocation6], %s160
          %s162 = sshll.u32 [#allocation5], 4
          %s163 = int_to_ptr.vmem [resolvable:$true] %s162
          %168 = dma.hbm_to_vmem [thread:$0]  %s1, 1536, %s163, [#allocation6], 384, 384, 24
        $region16: #{_forward_folded.1} parent=11 // pred_fallthru
          _
        // Predicated region
        $region17: #{_forward_folded.1} parent=11 // pred_check
          %p169 = pneg %p89
        $region18: #{_forward_folded.1} parent=11 // pred_check_branch
          %171 = sbr.rel (%p169) target = $region20
        $region19: #{_forward_folded.1} parent=11 // pred_region
          _
        $region20: #{_forward_folded.1} parent=11 // pred_fallthru
          _
      $region12: #{_forward_folded.1} parent=5 // pred_fallthru
        _
      %p172 = scmp.lt.s32.totalorder %s21, 2
      // Predicated region
      $region21: #{_forward_folded.1} parent=5 // pred_check
        %p173 = pneg %p172
      $region22: #{_forward_folded.1} parent=5 // pred_check_branch
        %175 = sbr.rel (%p173) target = $region24
      $region23: #{_forward_folded.1} parent=5 // pred_region
        // Predicated region
        $region25: #{_forward_folded.1} parent=23 // pred_check
          %p176 = pneg %p41
        $region26: #{_forward_folded.1} parent=23 // pred_check_branch
          %178 = sbr.rel (%p176) target = $region28
        $region27: #{_forward_folded.1} parent=23 // pred_region
          %s179 = sand.u32 %s31, 1
          %s180 = scalar_lea.sflag [#allocation3], %s179
          %s181 = sand.u32 %s31, 1
          %s182 = smul.addr %s181, 16
          %s183 = scalar_lea.vmem [#allocation2], %s182
          %s184 = smul.u32 2, %s21
          %s185 = ssub.s32 3, %s184
          %p186 = scmp.lt.s32.totalorder %s185, 2
          %s187 = scalar_select %p186, %s185, 2
          %s188 = smul.u32 128, %s187
          %s190 = ssub.s32 256, %s188
          %191 = vsyncadd %s180, %s190
          %p192 = scmp.ne.s32.totalorder 0, %s188
          %s193 = smul.addr %s184, 128
          %s194 = scalar_lea.hbm %s0, %s193
          %s195 = smul.u32 8, %s187
          %s196 = sshll.u32 %s183, 4
          %s197 = int_to_ptr.vmem [resolvable:$true] %s196
          %s198 = sshll.u32 %s195, 4
          %202 = dma.hbm_to_vmem [thread:$0]  (%p192), %s194, %s198, %s197, %s180, 128, 128, 8
        $region28: #{_forward_folded.1} parent=23 // pred_fallthru
          _
      $region24: #{_forward_folded.1} parent=5 // pred_fallthru
        _
      %p203 = scmp.le.s32.totalorder 1, %s21
      %p204 = scmp.lt.s32.totalorder %s21, 3
      %p205 = pnand %p203, %p204
      %p206 = pneg %p205
      // Predicated region
      $region29: #{_forward_folded.1} parent=5 // pred_check
        _
      $region30: #{_forward_folded.1} parent=5 // pred_check_branch
        %208 = sbr.rel (%p205) target = $region32
      $region31: #{_forward_folded.1} parent=5 // pred_region
        %s209 = ssub.s32 %s21, 1
        %s210 = sand.u32 %s34, 1
        %s211 = scalar_lea.sflag [#allocation3], %s210
        %s212 = sand.u32 %s34, 1
        %s213 = smul.addr %s212, 16
        %s214 = scalar_lea.vmem [#allocation2], %s213
        // Predicated region
        $region33: #{_forward_folded.1} parent=31 // pred_check
          %p215 = pneg %p47
        $region34: #{_forward_folded.1} parent=31 // pred_check_branch
          %217 = sbr.rel (%p215) target = $region36
        $region35: #{_forward_folded.1} parent=31 // pred_region
          %218 = dma.done %s211, 256
        $region36: #{_forward_folded.1} parent=31 // pred_fallthru
          _
        // Predicated region
        $region37: #{_forward_folded.1} parent=31 // pred_check
          %p219 = pneg %p68
        $region38: #{_forward_folded.1} parent=31 // pred_check_branch
          %221 = sbr.rel (%p219) target = $region40
        $region39: #{_forward_folded.1} parent=31 // pred_region
          %222 = dma.done [#allocation6], 1536
        $region40: #{_forward_folded.1} parent=31 // pred_fallthru
          _
        %s223 = sand.u32 %s34, 1
        %s224 = scalar_lea.sflag [#allocation3], %s223
        %s225 = sand.u32 %s34, 1
        %s226 = smul.addr %s225, 16
        %s227 = scalar_lea.vmem [#allocation2], %s226
        %p228 = pneg %p47
        %p229 = pneg %p44
        %p230 = pneg %p68
        %p231 = pneg %p65
        %p232 = pneg %p89
        %p233 = pneg %p86
        %p234 = pneg %p115
        %p235 = pneg %p112
        %s236 = sand.u32 %s102, 1
        %s237 = scalar_lea.sflag [#allocation4], %s236
        %s238 = sand.u32 %s102, 1
        %s239 = smul.addr %s238, 16
        %s240 = scalar_lea.vmem [#allocation7], %s239
        %p241 = pneg %p141
        %p242 = pneg %p138
        %s243 = sand.u32 %s128, 1
        %s244 = scalar_lea.sflag [#allocation9], %s243
        %s245 = sand.u32 %s128, 1
        %s246 = smul.addr %s245, 16
        %s247 = scalar_lea.vmem [#allocation8], %s246
        %s248 = smul.u32 2, %s26
        %s249 = ssub.s32 3, %s248
        %p250 = scmp.lt.s32.totalorder %s249, 2
        %s251 = scalar_select %p250, %s249, 2
        %s252 = smul.u32 128, %s251
        %s253 = smul.u32 2, %s26
        %s254 = ssub.s32 3, %s253
        %p255 = scmp.lt.s32.totalorder %s254, 2
        %s256 = scalar_select %p255, %s254, 2
        %s257 = smul.u32 128, %s256
        %s258 = smul.u32 2, %s26
        %s259 = ssub.s32 3, %s258
        %p260 = scmp.lt.s32.totalorder %s259, 2
        %s261 = scalar_select %p260, %s259, 2
        %s262 = smul.u32 128, %s261
        %v263 = vld [vmem:[%s214] sm:$0xff]
        %v264 = vld [vmem:[%s214 + $0x8] sm:$0xff]
        %v265 = vld [vmem:[#allocation5] sm:$0xff]
        %v266 = vld [vmem:[#allocation5 + $0x8] sm:$0xff]
        %v267 = vld [vmem:[#allocation5 + $0x10] sm:$0xff]
        %v268 = vld [vmem:[#allocation5 + $0x18] sm:$0xff]
        %v269 = vld [vmem:[#allocation5 + $0x20] sm:$0xff]
        %v270 = vld [vmem:[#allocation5 + $0x28] sm:$0xff]
        %v271 = vld [vmem:[#allocation5 + $0x30] sm:$0xff]
        %v272 = vld [vmem:[#allocation5 + $0x38] sm:$0xff]
        %v273 = vld [vmem:[#allocation5 + $0x40] sm:$0xff]
        %v274 = vld [vmem:[#allocation5 + $0x48] sm:$0xff]
        %v275 = vld [vmem:[#allocation5 + $0x50] sm:$0xff]
        %v276 = vld [vmem:[#allocation5 + $0x58] sm:$0xff]
        %v277 = vld [vmem:[%s2] sm:$0x7]
        %v279 = vlaneseq
        %v280 = vshrl.u32 %v279, 7
        %v281 = vsub.s32 0, %v280
        %v282 = vrot.slane %v277, %v281
        %v283 = vlaneseq
        %v284 = vshrl.u32 %v283, 7
        %v285 = vsub.s32 1, %v284
        %v286 = vrot.slane %v277, %v285
        %v287 = vlaneseq
        %v288 = vshrl.u32 %v287, 7
        %v289 = vsub.s32 2, %v288
        %v290 = vrot.slane %v277, %v289
        %vm294 = vcmask 261120
        %v296 = vsel %vm294, %v263, 0
        %v299 = vsel %vm294, %v264, 0
        %301 = vmatprep.subr.mxu0 0.0
        %302 = vmatpush1.msra.mxu0 0.0
        %303 = vmatprep.subr.mxu0 0.0
        %304 = vmatpush1.msra.mxu0 0.0
        %305 = vmatprep.subr.mxu0 0.0
        %306 = vmatpush1.msra.mxu0 0.0
        %307 = vmatprep.subr.mxu0 0.0
        %308 = vmatpush1.msra.mxu0 0.0
        %309 = vmatprep.subr.mxu0 0.0
        %310 = vmatpush1.msra.mxu0 0.0
        %311 = vmatprep.subr.mxu0 0.0
        %312 = vmatpush1.msra.mxu0 0.0
        %313 = vmatprep.subr.mxu0 0.0
        %314 = vmatpush1.msra.mxu0 0.0
        %315 = vmatprep.subr.mxu0 0.0
        %316 = vmatpush1.msra.mxu0 0.0
        %317 = vmatprep.subr.mxu0 0.0
        %318 = vmatpush1.msra.mxu0 0.0
        %319 = vmatprep.subr.mxu0 0.0
        %320 = vmatpush1.msra.mxu0 0.0
        %321 = vmatprep.subr.mxu0 0.0
        %322 = vmatpush1.msra.mxu0 0.0
        %323 = vmatprep.subr.mxu0 0.0
        %324 = vmatpush1.msra.mxu0 0.0
        %325 = vmatprep.subr.mxu0 %v275
        %326 = vmatpush1.msra.mxu0 %v274
        %327 = vmatprep.subr.mxu0 %v272
        %328 = vmatpush1.msra.mxu0 %v271
        %329 = vmatprep.subr.mxu0 %v269
        %330 = vmatpush1.msra.mxu0 %v268
        %331 = vmatprep.subr.mxu0 %v266
        %332 = vmatpush1.msra.mxu0 %v265
        %333 = vmatprep.subr.mxu0 0.0
        %334 = vmatpush2.msra.mxu0 0.0
        %335 = vmatprep.subr.mxu0 0.0
        %336 = vmatpush2.msra.mxu0 0.0
        %337 = vmatprep.subr.mxu0 0.0
        %338 = vmatpush2.msra.mxu0 0.0
        %339 = vmatprep.subr.mxu0 0.0
        %340 = vmatpush2.msra.mxu0 0.0
        %341 = vmatprep.subr.mxu0 0.0
        %342 = vmatpush2.msra.mxu0 0.0
        %343 = vmatprep.subr.mxu0 0.0
        %344 = vmatpush2.msra.mxu0 0.0
        %345 = vmatprep.subr.mxu0 0.0
        %346 = vmatpush2.msra.mxu0 0.0
        %347 = vmatprep.subr.mxu0 0.0
        %348 = vmatpush2.msra.mxu0 0.0
        %349 = vmatprep.subr.mxu0 0.0
        %350 = vmatpush2.msra.mxu0 0.0
        %351 = vmatprep.subr.mxu0 0.0
        %352 = vmatpush2.msra.mxu0 0.0
        %353 = vmatprep.subr.mxu0 0.0
        %354 = vmatpush2.msra.mxu0 0.0
        %355 = vmatprep.subr.mxu0 0.0
        %356 = vmatpush2.msra.mxu0 0.0
        %357 = vmatprep.subr.mxu0 0.0
        %358 = vmatpush2.msra.mxu0 0.0
        %359 = vmatprep.subr.mxu0 0.0
        %360 = vmatpush2.msra.mxu0 0.0
        %361 = vmatprep.subr.mxu0 0.0
        %362 = vmatpush2.msra.mxu0 0.0
        %363 = vmatprep.subr.mxu0 0.0
        %364 = vmatpush2.msra.mxu0 0.0
        %365 = vmatprep.mubr.f32.mxu0 0.0
        %366 = vmatmul.mubr.f32.gmra.mxu0 %v296
        %v367 = vpop.f32.mrf.mxu0
        %v368 = vadd.f32 %v282, %v367
        %v369 = vpop.f32.mrf.mxu0
        %v370 = vadd.f32 %v286, %v369
        %371 = vmatprep.mubr.f32.mxu0 0.0
        %372 = vmatmul.mubr.f32.gmra.mxu0 %v299
        %v373 = vpop.f32.mrf.mxu0
        %v374 = vadd.f32 %v282, %v373
        %v375 = vpop.f32.mrf.mxu0
        %v376 = vadd.f32 %v286, %v375
        %377 = vdwg.mxu0
        %378 = vmatprep.subr.mxu0 0.0
        %379 = vmatpush1.msra.mxu0 0.0
        %380 = vmatprep.subr.mxu0 0.0
        %381 = vmatpush1.msra.mxu0 0.0
        %382 = vmatprep.subr.mxu0 0.0
        %383 = vmatpush1.msra.mxu0 0.0
        %384 = vmatprep.subr.mxu0 0.0
        %385 = vmatpush1.msra.mxu0 0.0
        %386 = vmatprep.subr.mxu0 0.0
        %387 = vmatpush1.msra.mxu0 0.0
        %388 = vmatprep.subr.mxu0 0.0
        %389 = vmatpush1.msra.mxu0 0.0
        %390 = vmatprep.subr.mxu0 0.0
        %391 = vmatpush1.msra.mxu0 0.0
        %392 = vmatprep.subr.mxu0 0.0
        %393 = vmatpush1.msra.mxu0 0.0
        %394 = vmatprep.subr.mxu0 0.0
        %395 = vmatpush1.msra.mxu0 0.0
        %396 = vmatprep.subr.mxu0 0.0
        %397 = vmatpush1.msra.mxu0 0.0
        %398 = vmatprep.subr.mxu0 0.0
        %399 = vmatpush1.msra.mxu0 0.0
        %400 = vmatprep.subr.mxu0 0.0
        %401 = vmatpush1.msra.mxu0 0.0
        %402 = vmatprep.subr.mxu0 0.0
        %403 = vmatpush1.msra.mxu0 %v276
        %404 = vmatprep.subr.mxu0 0.0
        %405 = vmatpush1.msra.mxu0 %v273
        %406 = vmatprep.subr.mxu0 0.0
        %407 = vmatpush1.msra.mxu0 %v270
        %408 = vmatprep.subr.mxu0 0.0
        %409 = vmatpush1.msra.mxu0 %v267
        %410 = vmatprep.subr.mxu0 0.0
        %411 = vmatpush2.msra.mxu0 0.0
        %412 = vmatprep.subr.mxu0 0.0
        %413 = vmatpush2.msra.mxu0 0.0
        %414 = vmatprep.subr.mxu0 0.0
        %415 = vmatpush2.msra.mxu0 0.0
        %416 = vmatprep.subr.mxu0 0.0
        %417 = vmatpush2.msra.mxu0 0.0
        %418 = vmatprep.subr.mxu0 0.0
        %419 = vmatpush2.msra.mxu0 0.0
        %420 = vmatprep.subr.mxu0 0.0
        %421 = vmatpush2.msra.mxu0 0.0
        %422 = vmatprep.subr.mxu0 0.0
        %423 = vmatpush2.msra.mxu0 0.0
        %424 = vmatprep.subr.mxu0 0.0
        %425 = vmatpush2.msra.mxu0 0.0
        %426 = vmatprep.subr.mxu0 0.0
        %427 = vmatpush2.msra.mxu0 0.0
        %428 = vmatprep.subr.mxu0 0.0
        %429 = vmatpush2.msra.mxu0 0.0
        %430 = vmatprep.subr.mxu0 0.0
        %431 = vmatpush2.msra.mxu0 0.0
        %432 = vmatprep.subr.mxu0 0.0
        %433 = vmatpush2.msra.mxu0 0.0
        %434 = vmatprep.subr.mxu0 0.0
        %435 = vmatpush2.msra.mxu0 0.0
        %436 = vmatprep.subr.mxu0 0.0
        %437 = vmatpush2.msra.mxu0 0.0
        %438 = vmatprep.subr.mxu0 0.0
        %439 = vmatpush2.msra.mxu0 0.0
        %440 = vmatprep.subr.mxu0 0.0
        %441 = vmatpush2.msra.mxu0 0.0
        %442 = vmatprep.mubr.f32.mxu0 0.0
        %443 = vmatmul.mubr.f32.gmra.mxu0 %v296
        %v444 = vpop.f32.mrf.mxu0
        %v445 = vadd.f32 %v290, %v444
        %v446 = vpop.f32.mrf.mxu0
        %447 = vmatprep.mubr.f32.mxu0 0.0
        %448 = vmatmul.mubr.f32.gmra.mxu0 %v299
        %v449 = vpop.f32.mrf.mxu0
        %v450 = vadd.f32 %v290, %v449
        %v451 = vpop.f32.mrf.mxu0
        %452 = vdwg.mxu0
        %v453 = vxor.u32 %v445, 2147483648
        %v454 = vxor.u32 %v450, 2147483648
        %v455 = vmul.f32 %v453, 1.442695
        %v456 = vpow.pop %v455
        %v457 = vmul.f32 %v454, 1.442695
        %v458 = vpow.pop %v457
        %v459 = vadd.f32 %v456, 1.0
        %v460 = vadd.f32 %v458, 1.0
        %v461 = vrcp.pop %v459
        %v462 = vmul.f32 1.0, %v461
        %v463 = vrcp.pop %v460
        %v464 = vmul.f32 1.0, %v463
        %v465 = vsub.f32 %v368, %v370
        %v466 = vsub.f32 %v374, %v376
        %v467 = vmul.f32 %v462, %v465
        %v468 = vmul.f32 %v464, %v466
        %v469 = vadd.f32 %v370, %v467
        %v470 = vadd.f32 %v376, %v468
        %471 = vst.msk [vmem:[%s240] sm:$0xff] %vm294, %v469
        %472 = vst.msk [vmem:[%s240 + $0x8] sm:$0xff] %vm294, %v470
        %473 = vst.msk [vmem:[%s247] sm:$0xff] %vm294, %v462
        %474 = vst.msk [vmem:[%s247 + $0x8] sm:$0xff] %vm294, %v464
        %s475 = sand.u32 %s102, 1
        %s476 = scalar_lea.sflag [#allocation4], %s475
        %s477 = sand.u32 %s102, 1
        %s478 = smul.addr %s477, 16
        %s479 = scalar_lea.vmem [#allocation7], %s478
        %s480 = sand.u32 %s128, 1
        %s481 = scalar_lea.sflag [#allocation9], %s480
        %s482 = sand.u32 %s128, 1
        %s483 = smul.addr %s482, 16
        %s484 = scalar_lea.vmem [#allocation8], %s483
        // Predicated region
        $region41: #{_forward_folded.1} parent=31 // pred_check
          %p485 = pneg %p112
        $region42: #{_forward_folded.1} parent=31 // pred_check_branch
          %487 = sbr.rel (%p485) target = $region44
        $region43: #{_forward_folded.1} parent=31 // pred_region
          %s488 = smul.u32 2, %s26
          %s489 = ssub.s32 3, %s488
          %p490 = scmp.lt.s32.totalorder %s489, 2
          %s491 = scalar_select %p490, %s489, 2
          %s492 = smul.u32 128, %s491
          %s494 = ssub.s32 256, %s492
          %495 = vsyncadd %s476, %s494
          %p496 = scmp.ne.s32.totalorder 0, %s492
          %s497 = smul.addr %s488, 128
          %s498 = scalar_lea.hbm %s3, %s497
          %s499 = smul.u32 8, %s491
          %s500 = sshll.u32 %s479, 4
          %s501 = int_to_ptr.vmem [resolvable:$true] %s500
          %s502 = sshll.u32 %s499, 4
          %506 = dma.vmem_to_hbm [thread:$0]  (%p496), %s501, %s502, %s498, %s476, 128, 128, 8
        $region44: #{_forward_folded.1} parent=31 // pred_fallthru
          _
        // Predicated region
        $region45: #{_forward_folded.1} parent=31 // pred_check
          %p507 = pneg %p138
        $region46: #{_forward_folded.1} parent=31 // pred_check_branch
          %509 = sbr.rel (%p507) target = $region48
        $region47: #{_forward_folded.1} parent=31 // pred_region
          %s510 = smul.u32 2, %s26
          %s511 = ssub.s32 3, %s510
          %p512 = scmp.lt.s32.totalorder %s511, 2
          %s513 = scalar_select %p512, %s511, 2
          %s514 = smul.u32 128, %s513
          %s516 = ssub.s32 256, %s514
          %517 = vsyncadd %s481, %s516
          %p518 = scmp.ne.s32.totalorder 0, %s514
          %s519 = smul.addr %s510, 128
          %s520 = scalar_lea.hbm %s4, %s519
          %s521 = smul.u32 8, %s513
          %s522 = sshll.u32 %s484, 4
          %s523 = int_to_ptr.vmem [resolvable:$true] %s522
          %s524 = sshll.u32 %s521, 4
          %528 = dma.vmem_to_hbm [thread:$0]  (%p518), %s523, %s524, %s520, %s481, 128, 128, 8
        $region48: #{_forward_folded.1} parent=31 // pred_fallthru
          _
      $region32: #{_forward_folded.1} parent=5 // pred_fallthru
        _
      %p529 = scmp.le.s32.totalorder 2, %s21
      // Predicated region
      $region49: #{_forward_folded.1} parent=5 // pred_check
        %p530 = pneg %p529
      $region50: #{_forward_folded.1} parent=5 // pred_check_branch
        %532 = sbr.rel (%p530) target = $region52
      $region51: #{_forward_folded.1} parent=5 // pred_region
        %s533 = ssub.s32 %s21, 2
        // Predicated region
        $region53: #{_forward_folded.1} parent=51 // pred_check
          %p534 = pneg %p118
        $region54: #{_forward_folded.1} parent=51 // pred_check_branch
          %536 = sbr.rel (%p534) target = $region56
        $region55: #{_forward_folded.1} parent=51 // pred_region
          %s537 = sand.u32 %s103, 1
          %s538 = scalar_lea.sflag [#allocation4], %s537
          %s539 = sand.u32 %s103, 1
          %s540 = smul.addr %s539, 16
          %s541 = scalar_lea.vmem [#allocation7], %s540
          %542 = dma.done %s538, 256
        $region56: #{_forward_folded.1} parent=51 // pred_fallthru
          _
        // Predicated region
        $region57: #{_forward_folded.1} parent=51 // pred_check
          %p543 = pneg %p144
        $region58: #{_forward_folded.1} parent=51 // pred_check_branch
          %545 = sbr.rel (%p543) target = $region60
        $region59: #{_forward_folded.1} parent=51 // pred_region
          %s546 = sand.u32 %s129, 1
          %s547 = scalar_lea.sflag [#allocation9], %s546
          %s548 = sand.u32 %s129, 1
          %s549 = smul.addr %s548, 16
          %s550 = scalar_lea.vmem [#allocation8], %s549
          %551 = dma.done %s547, 256
        $region60: #{_forward_folded.1} parent=51 // pred_fallthru
          _
      $region52: #{_forward_folded.1} parent=5 // pred_fallthru
        _
    $region6: #{_forward_folded.1} parent=1 // loop_footer
      %s25 = sadd.s32 1, %s21
    $region7: #{_forward_folded.1} parent=1 // loop_footer_branch
      %20 = sbr.rel target = $region3
    $region8: #{_forward_folded.1} parent=1 // loop_exit
      _
    %552 = vsyncpa [#allocation3], 1
    %s553 = scalar_lea.sflag [#allocation3], 1
    %554 = vsyncpa %s553, 1
    %555 = vsyncpa [#allocation6], 1
    %556 = vsyncpa [#allocation4], 1
    %s557 = scalar_lea.sflag [#allocation4], 1
    %558 = vsyncpa %s557, 1
    %559 = vsyncpa [#allocation9], 1
    %s560 = scalar_lea.sflag [#allocation9], 1
    %561 = vsyncpa %s560, 1

</llo_original>
